<compile_context>
chip_gen: v7x
topology: tpu7x:2x2x1
jax: 0.10.0
libtpu: 0.0.40
codegen_flags: <defaults>
</compile_context>

<pallas_src>
import jax
import jax.numpy as jnp
from jax.experimental import pallas as pl
from jax.experimental.pallas import tpu as pltpu


def decoder_d_kernel(he_ref, emb_ref, h0_ref, c0_ref,
                     w_he_ref, w_emb_ref, w_hh_ref, b_ref,
                     h_ref, c_ref):
    """Fused single LSTM-cell step (affine already folded into weights).

    he_ref:   (B, H)      f32   hiddens_e[:, 0, :]
    emb_ref:  (B, E)      f32   embedding rows for caption[:, 0]
    h0_ref:   (B, H)      f32   previous hidden state (zeros if states=None)
    c0_ref:   (B, H)      f32   previous cell state   (zeros if states=None)
    w_he_ref: (H, 4*Hp)   bf16  folded  W_aff @ W_ih_x, gate-padded to Hp
    w_emb_ref:(E, 4*Hp)   bf16  W_ih_e, gate-padded
    w_hh_ref: (H, 4*Hp)   f32   W_hh,   gate-padded (recurrent path kept f32)
    b_ref:    (1, 4*Hp)   f32   fused bias, gate-padded
    h_ref:    (B, H)      f32   output hidden state
    c_ref:    (B, H)      f32   output cell state
    """
    H = c0_ref.shape[-1]
    Hp = w_hh_ref.shape[-1] // 4          # per-gate column width (128-aligned)

    # Three MXU dots, all accumulated in f32.  Activation casts to bf16 happen
    # in-kernel (VPU), so no extra wrapper-side XLA ops / HBM round-trips.
    gates = jnp.dot(he_ref[...].astype(jnp.bfloat16), w_he_ref[...],
                    preferred_element_type=jnp.float32)
    gates = gates + jnp.dot(emb_ref[...].astype(jnp.bfloat16), w_emb_ref[...],
                            preferred_element_type=jnp.float32)
    gates = gates + jnp.dot(h0_ref[...], w_hh_ref[...],
                            preferred_element_type=jnp.float32)
    gates = gates + b_ref[...]

    # PyTorch LSTM gate ordering: i, f, g, o.  Each gate's column block starts
    # on a 128-lane boundary (Hp is a multiple of 128), so slicing is
    # vreg-aligned; only the first H columns of each block are meaningful.
    i = jax.nn.sigmoid(gates[:, 0 * Hp:0 * Hp + H])
    f = jax.nn.sigmoid(gates[:, 1 * Hp:1 * Hp + H])
    g = jnp.tanh(gates[:, 2 * Hp:2 * Hp + H])
    o = jax.nn.sigmoid(gates[:, 3 * Hp:3 * Hp + H])

    c = f * c0_ref[...] + i * g
    h = o * jnp.tanh(c)

    # Two direct, separate stores (no in-kernel lane concat).
    h_ref[...] = h
    c_ref[...] = c


def init_decoder_d_params(key, embed_size, hidden_size, vocab_size):
    """Deterministic synthetic parameters matching Decoder_D.__init__ shapes."""
    ks = jax.random.split(key, 7)
    E, H, V = embed_size, hidden_size, vocab_size
    s = 0.1
    return {
        "embed":  (s * jax.random.normal(ks[0], (V, E))).astype(jnp.float32),
        # nn.Linear(hidden_size, embed_size): weight (E, H) -> stored (H, E)
        "w_aff":  (s * jax.random.normal(ks[1], (H, E))).astype(jnp.float32),
        "b_aff":  (s * jax.random.normal(ks[2], (1, E))).astype(jnp.float32),
        # nn.LSTM(2E, H): W_ih (4H, 2E) -> stored transposed, split by halves
        "w_ih_x": (s * jax.random.normal(ks[3], (E, 4 * H))).astype(jnp.float32),
        "w_ih_e": (s * jax.random.normal(ks[4], (E, 4 * H))).astype(jnp.float32),
        # W_hh (4H, H) -> stored (H, 4H)
        "w_hh":   (s * jax.random.normal(ks[5], (H, 4 * H))).astype(jnp.float32),
        # b_ih + b_hh, fused
        "b":      (s * jax.random.normal(ks[6], (1, 4 * H))).astype(jnp.float32),
    }


def fold_decoder_d_params(params):
    """One-time (offline) fusion of the affine into the LSTM weights, plus
    per-gate column padding to a multiple of 128 lanes."""
    H = params["w_hh"].shape[0]
    E = params["w_aff"].shape[1]
    Hp = ((H + 127) // 128) * 128         # padded per-gate width

    def pad_gates(w):
        # (rows, 4H) -> (rows, 4*Hp): pad each gate's column block to Hp.
        rows = w.shape[0]
        w4 = w.reshape(rows, 4, H)
        w4 = jnp.pad(w4, ((0, 0), (0, 0), (0, Hp - H)))
        return w4.reshape(rows, 4 * Hp)

    # Folded he-path weight: (H, 4H) = (H, E) @ (E, 4H)
    w_fold = params["w_aff"] @ params["w_ih_x"]
    # Fused bias: b_ih + b_hh + b_aff @ W_ih_x
    b_total = params["b"] + params["b_aff"] @ params["w_ih_x"]

    return {
        "embed":  params["embed"],
        "w_he":   pad_gates(w_fold).astype(jnp.bfloat16),          # (H, 4Hp)
        "w_emb":  pad_gates(params["w_ih_e"]).astype(jnp.bfloat16),  # (E, 4Hp)
        "w_hh":   pad_gates(params["w_hh"]).astype(jnp.float32),     # (H, 4Hp)
        "b":      pad_gates(b_total).astype(jnp.float32),            # (1, 4Hp)
        "hidden_size": H,
        "embed_size": E,
    }


def decoder_d_forward(folded, hiddens_e, caption, states=None):
    """Mirrors Decoder_D.forward.

    hiddens_e: (B, 1, H) float32
    caption:   (B, 1)    int32 token ids
    returns (hiddens (B,1,H), (h_n (1,B,H), c_n (1,B,H)), cells (B,1,H))
    """
    B, S, H = hiddens_e.shape
    assert S == 1
    assert H == folded["hidden_size"]

    # Embedding lookup (gather) kept as JAX glue for the single-step forward.
    emb = jnp.take(folded["embed"], caption[:, 0], axis=0)          # (B, E)
    he = hiddens_e[:, 0, :]                                         # (B, H)

    if states is None:
        h0 = jnp.zeros((B, H), jnp.float32)
        c0 = jnp.zeros((B, H), jnp.float32)
    else:
        h0 = states[0][0].astype(jnp.float32)
        c0 = states[1][0].astype(jnp.float32)

    vmem = pl.BlockSpec(memory_space=pltpu.MemorySpace.VMEM)
    h, c = pl.pallas_call(
        decoder_d_kernel,
        out_shape=(jax.ShapeDtypeStruct((B, H), jnp.float32),
                   jax.ShapeDtypeStruct((B, H), jnp.float32)),
        in_specs=[vmem] * 8,
        out_specs=(vmem, vmem),
        compiler_params=pltpu.CompilerParams(
            # Above the v5e default (16 MiB), equal to the v6e/v7x default;
            # raise for production H/E so weights + buffers stay VMEM-resident.
            vmem_limit_bytes=32 * 1024 * 1024),
    )(he, emb, h0, c0,
      folded["w_he"], folded["w_emb"], folded["w_hh"], folded["b"])

    hiddens = h[:, None, :]                      # hiddens[:, 0, :] = h_t
    h_n = h[None, :, :]                          # states[0]
    c_n = c[None, :, :]                          # states[1]
    cells = c[:, None, :]                        # cells[0]=c_n ; transpose(0,1)
    return hiddens, (h_n, c_n), cells


def decoder_d_reference(params, hiddens_e, caption, states=None):
    """Pure-JAX f32 reference (mirrors the PyTorch module exactly)."""
    B, S, H = hiddens_e.shape
    emb = jnp.take(params["embed"], caption[:, 0], axis=0)
    he = hiddens_e[:, 0, :]
    h0 = jnp.zeros((B, H)) if states is None else states[0][0]
    c0 = jnp.zeros((B, H)) if states is None else states[1][0]
    x_aff = he @ params["w_aff"] + params["b_aff"]
    gates = (x_aff @ params["w_ih_x"] + emb @ params["w_ih_e"]
             + h0 @ params["w_hh"] + params["b"])
    i = jax.nn.sigmoid(gates[:, 0 * H:1 * H])
    f = jax.nn.sigmoid(gates[:, 1 * H:2 * H])
    g = jnp.tanh(gates[:, 2 * H:3 * H])
    o = jax.nn.sigmoid(gates[:, 3 * H:4 * H])
    c = f * c0 + i * g
    h = o * jnp.tanh(c)
    return h[:, None, :], (h[None], c[None]), c[:, None, :]


if __name__ == "__main__":
    embed_size, hidden_size, vocab_size = 16, 32, 50
    B = 2

    key = jax.random.PRNGKey(0)
    k_p, k_h, k_c = jax.random.split(key, 3)

    params = init_decoder_d_params(k_p, embed_size, hidden_size, vocab_size)
    folded = fold_decoder_d_params(params)

    hiddens_e = jax.random.normal(k_h, (B, 1, hidden_size), dtype=jnp.float32)
    caption = jax.random.randint(k_c, (B, 1), 0, vocab_size, dtype=jnp.int32)

    # Step 1: states=None path.
    hiddens, states, cells = decoder_d_forward(folded, hiddens_e, caption)
    jax.block_until_ready((hiddens, states, cells))

    assert hiddens.shape == (B, 1, hidden_size)
    assert states[0].shape == (1, B, hidden_size)
    assert states[1].shape == (1, B, hidden_size)
    assert cells.shape == (B, 1, hidden_size)

    h_ref, s_ref, c_ref = decoder_d_reference(params, hiddens_e, caption)
    assert jnp.allclose(hiddens, h_ref, atol=5e-2), "hiddens mismatch (step 1)"
    assert jnp.allclose(cells, c_ref, atol=5e-2), "cells mismatch (step 1)"

    # Step 2: recurrent path with provided states (W_hh path is f32).
    hiddens2, states2, cells2 = decoder_d_forward(folded, hiddens_e, caption,
                                                  states=states)
    jax.block_until_ready((hiddens2, states2, cells2))
    h_ref2, s_ref2, c_ref2 = decoder_d_reference(params, hiddens_e, caption,
                                                 states=s_ref)
    assert jnp.allclose(hiddens2, h_ref2, atol=5e-2), "hiddens mismatch (step 2)"
    assert jnp.allclose(cells2, c_ref2, atol=5e-2), "cells mismatch (step 2)"

    print("KERNEL_OK")
</pallas_src>

<mosaic_0001>
module attributes {stable_mosaic.version = 11 : i64} {
  func.func @decoder_d_kernel(%arg0: memref<2x32xf32, #tpu.memory_space<vmem>>, %arg1: memref<2x16xf32, #tpu.memory_space<vmem>>, %arg2: memref<2x32xf32, #tpu.memory_space<vmem>>, %arg3: memref<2x32xf32, #tpu.memory_space<vmem>>, %arg4: memref<32x512xbf16, #tpu.memory_space<vmem>>, %arg5: memref<16x512xbf16, #tpu.memory_space<vmem>>, %arg6: memref<32x512xf32, #tpu.memory_space<vmem>>, %arg7: memref<1x512xf32, #tpu.memory_space<vmem>>, %arg8: memref<2x32xf32, #tpu.memory_space<vmem>>, %arg9: memref<2x32xf32, #tpu.memory_space<vmem>>) attributes {dimension_semantics = [], scalar_prefetch = 0 : i64, scratch_operands = 0 : i64, tpu.core_type = #tpu.core_type<tc>} {
    %c0 = arith.constant 0 : index
    %c0_0 = arith.constant 0 : index
    %0 = vector.load %arg0[%c0, %c0_0] : memref<2x32xf32, #tpu.memory_space<vmem>>, vector<2x32xf32>
    %1 = arith.truncf %0 : vector<2x32xf32> to vector<2x32xbf16>
    %c0_1 = arith.constant 0 : index
    %c0_2 = arith.constant 0 : index
    %2 = vector.load %arg4[%c0_1, %c0_2] : memref<32x512xbf16, #tpu.memory_space<vmem>>, vector<32x512xbf16>
    %cst = arith.constant dense<0.000000e+00> : vector<2x512xf32>
    %3 = tpu.matmul %1, %2, %cst {dimension_numbers = #tpu.dot_dimension_numbers<[1], [0], [0], [1], [0, 0, 1, 1], [], []>} : vector<2x32xbf16>, vector<32x512xbf16>, vector<2x512xf32> -> vector<2x512xf32>
    %c0_3 = arith.constant 0 : index
    %c0_4 = arith.constant 0 : index
    %4 = vector.load %arg1[%c0_3, %c0_4] : memref<2x16xf32, #tpu.memory_space<vmem>>, vector<2x16xf32>
    %5 = arith.truncf %4 : vector<2x16xf32> to vector<2x16xbf16>
    %c0_5 = arith.constant 0 : index
    %c0_6 = arith.constant 0 : index
    %6 = vector.load %arg5[%c0_5, %c0_6] : memref<16x512xbf16, #tpu.memory_space<vmem>>, vector<16x512xbf16>
    %cst_7 = arith.constant dense<0.000000e+00> : vector<2x512xf32>
    %7 = tpu.matmul %5, %6, %cst_7 {dimension_numbers = #tpu.dot_dimension_numbers<[1], [0], [0], [1], [0, 0, 1, 1], [], []>} : vector<2x16xbf16>, vector<16x512xbf16>, vector<2x512xf32> -> vector<2x512xf32>
    %8 = arith.addf %3, %7 : vector<2x512xf32>
    %c0_8 = arith.constant 0 : index
    %c0_9 = arith.constant 0 : index
    %9 = vector.load %arg2[%c0_8, %c0_9] : memref<2x32xf32, #tpu.memory_space<vmem>>, vector<2x32xf32>
    %c0_10 = arith.constant 0 : index
    %c0_11 = arith.constant 0 : index
    %10 = vector.load %arg6[%c0_10, %c0_11] : memref<32x512xf32, #tpu.memory_space<vmem>>, vector<32x512xf32>
    %cst_12 = arith.constant dense<0.000000e+00> : vector<2x512xf32>
    %11 = tpu.matmul %9, %10, %cst_12 {dimension_numbers = #tpu.dot_dimension_numbers<[1], [0], [0], [1], [0, 0, 1, 1], [], []>} : vector<2x32xf32>, vector<32x512xf32>, vector<2x512xf32> -> vector<2x512xf32>
    %12 = arith.addf %8, %11 : vector<2x512xf32>
    %c0_13 = arith.constant 0 : index
    %c0_14 = arith.constant 0 : index
    %13 = vector.load %arg7[%c0_13, %c0_14] : memref<1x512xf32, #tpu.memory_space<vmem>>, vector<1x512xf32>
    %14 = vector.broadcast %13 : vector<1x512xf32> to vector<2x512xf32>
    %15 = arith.addf %12, %14 : vector<2x512xf32>
    %16 = vector.extract_strided_slice %15 {offsets = [0, 0], sizes = [2, 32], strides = [1, 1]} : vector<2x512xf32> to vector<2x32xf32>
    %17 = arith.negf %16 : vector<2x32xf32>
    %18 = math.exp %17 : vector<2x32xf32>
    %cst_15 = arith.constant 1.000000e+00 : f32
    %19 = vector.broadcast %cst_15 : f32 to vector<2x32xf32>
    %20 = arith.addf %19, %18 : vector<2x32xf32>
    %21 = arith.divf %19, %20 : vector<2x32xf32>
    %22 = vector.extract_strided_slice %15 {offsets = [0, 128], sizes = [2, 32], strides = [1, 1]} : vector<2x512xf32> to vector<2x32xf32>
    %23 = arith.negf %22 : vector<2x32xf32>
    %24 = math.exp %23 : vector<2x32xf32>
    %cst_16 = arith.constant 1.000000e+00 : f32
    %25 = vector.broadcast %cst_16 : f32 to vector<2x32xf32>
    %26 = arith.addf %25, %24 : vector<2x32xf32>
    %27 = arith.divf %25, %26 : vector<2x32xf32>
    %28 = vector.extract_strided_slice %15 {offsets = [0, 256], sizes = [2, 32], strides = [1, 1]} : vector<2x512xf32> to vector<2x32xf32>
    %29 = math.tanh %28 : vector<2x32xf32>
    %30 = vector.extract_strided_slice %15 {offsets = [0, 384], sizes = [2, 32], strides = [1, 1]} : vector<2x512xf32> to vector<2x32xf32>
    %31 = arith.negf %30 : vector<2x32xf32>
    %32 = math.exp %31 : vector<2x32xf32>
    %cst_17 = arith.constant 1.000000e+00 : f32
    %33 = vector.broadcast %cst_17 : f32 to vector<2x32xf32>
    %34 = arith.addf %33, %32 : vector<2x32xf32>
    %35 = arith.divf %33, %34 : vector<2x32xf32>
    %c0_18 = arith.constant 0 : index
    %c0_19 = arith.constant 0 : index
    %36 = vector.load %arg3[%c0_18, %c0_19] : memref<2x32xf32, #tpu.memory_space<vmem>>, vector<2x32xf32>
    %37 = arith.mulf %27, %36 : vector<2x32xf32>
    %38 = arith.mulf %21, %29 : vector<2x32xf32>
    %39 = arith.addf %37, %38 : vector<2x32xf32>
    %40 = math.tanh %39 : vector<2x32xf32>
    %41 = arith.mulf %35, %40 : vector<2x32xf32>
    %c0_20 = arith.constant 0 : index
    %c0_21 = arith.constant 0 : index
    %42 = vector.load %arg8[%c0_20, %c0_21] : memref<2x32xf32, #tpu.memory_space<vmem>>, vector<2x32xf32>
    tpu.vector_store %arg8[%c0_20, %c0_21], %41 {strides = array<i32>} : memref<2x32xf32, #tpu.memory_space<vmem>>, vector<2x32xf32>,
    %c0_22 = arith.constant 0 : index
    %c0_23 = arith.constant 0 : index
    %43 = vector.load %arg9[%c0_22, %c0_23] : memref<2x32xf32, #tpu.memory_space<vmem>>, vector<2x32xf32>
    tpu.vector_store %arg9[%c0_22, %c0_23], %39 {strides = array<i32>} : memref<2x32xf32, #tpu.memory_space<vmem>>, vector<2x32xf32>,
    return
  }
}

</mosaic_0001>

<llo_original>
// kernel: tpu_custom_call.1
$region0: #{tpu_custom_call.1}
  #allocation0 [shape = 'u32[]', space=smem, size = 0x4, offset = 0x4, fixed_abs, tag = 'smem constant byte address 0x4 - core index']
  #allocation1 [shape = 'u32[144,128]{1,0:T(1,128)}', space=vmem, size = 0x12000, scoped, tag = 'internal scratch']
  %s0 = inlined_call_operand.hbm [shape: f32[2,32], index: 0, kind: input, shape index: {}]
  %s1 = inlined_call_operand.vmem [shape: f32[2,16], index: 1, kind: input, shape index: {}]
  %s2 = inlined_call_operand.hbm [shape: f32[2,32], index: 2, kind: input, shape index: {}]
  %s3 = inlined_call_operand.vmem [shape: f32[2,32], index: 3, kind: input, shape index: {}]
  %s4 = inlined_call_operand.hbm [shape: bf16[32,512], index: 4, kind: input, shape index: {}]
  %s5 = inlined_call_operand.hbm [shape: bf16[16,512], index: 5, kind: input, shape index: {}]
  %s6 = inlined_call_operand.hbm [shape: f32[32,512], index: 6, kind: input, shape index: {}]
  %s7 = inlined_call_operand.vmem [shape: f32[1,512], index: 7, kind: input, shape index: {}]
  %s8 = inlined_call_operand.hbm [shape: f32[2,32], index: 8, kind: output, shape index: {0}]
  %s9 = inlined_call_operand.hbm [shape: f32[2,32], index: 9, kind: output, shape index: {1}]
  %10 = xla_tuple %s8, %s9
  %s11 = sld [smem:[#allocation0]]
  $region70: #{tpu_custom_call.1} parent=0
    _
  %s13 = ssub.s32 1, %s11
  %s14 = scalar_select 0, %s13, %s11
  $region1: #{tpu_custom_call.1} parent=0
    #allocation2 [shape = 'u8[1024]{0}', space=vmem, size = 0x400, scoped, tag = 'input window, operand 0, single buffered']
    #allocation3 [shape = 's32[1]{0}', space=sflag, size = 0x4, scoped, tag = 'scoped memory for tpu_custom_call.1']
    #allocation4 [shape = 's32[1]{0}', space=sflag, size = 0x4, scoped, tag = 'scoped memory for tpu_custom_call.1']
    #allocation5 [shape = 'u8[1024]{0}', space=vmem, size = 0x400, scoped, tag = 'input window, operand 2, single buffered']
    #allocation6 [shape = 's32[1]{0}', space=sflag, size = 0x4, scoped, tag = 'scoped memory for tpu_custom_call.1']
    #allocation7 [shape = 'u8[32768]{0}', space=vmem, size = 0x8000, scoped, tag = 'input window, operand 4, single buffered']
    #allocation8 [shape = 'u8[16384]{0}', space=vmem, size = 0x4000, scoped, tag = 'input window, operand 5, single buffered']
    #allocation9 [shape = 's32[1]{0}', space=sflag, size = 0x4, scoped, tag = 'scoped memory for tpu_custom_call.1']
    #allocation10 [shape = 'u8[65536]{0}', space=vmem, size = 0x10000, scoped, tag = 'input window, operand 6, single buffered']
    #allocation11 [shape = 'u8[1024]{0}', space=vmem, size = 0x400, scoped, tag = 'output window, operand 0, single buffered']
    #allocation12 [shape = 'u8[1024]{0}', space=vmem, size = 0x400, scoped, tag = 'output window, operand 1, single buffered']
    #allocation13 [shape = 's32[1]{0}', space=sflag, size = 0x4, scoped, tag = 'scoped memory for tpu_custom_call.1']
    %15 = vsyncpa [#allocation3], 0
    %16 = vsyncpa [#allocation6], 0
    %17 = vsyncpa [#allocation9], 0
    %18 = vsyncpa [#allocation4], 0
    %19 = vsyncpa [#allocation13], 0
    // Predicated region
    $region2: #{tpu_custom_call.1} parent=1 // pred_check
      _
    $region3: #{tpu_custom_call.1} parent=1 // pred_check_branch
      %21 = sbr.rel (0) target = $region5
    $region4: #{tpu_custom_call.1} parent=1 // pred_region
      %s23 = ssub.s32 32, 32
      %24 = vsyncadd [#allocation3], %s23
      %s26 = sshll.u32 [#allocation2], 4
      %s27 = int_to_ptr.vmem [resolvable:$true] %s26
      %29 = dma.hbm_to_vmem [thread:$0]  %s0, 32, %s27, [#allocation3]
    $region5: #{tpu_custom_call.1} parent=1 // pred_fallthru
      _
    // Predicated region
    $region6: #{tpu_custom_call.1} parent=1 // pred_check
      _
    $region7: #{tpu_custom_call.1} parent=1 // pred_check_branch
      %31 = sbr.rel (0) target = $region9
    $region8: #{tpu_custom_call.1} parent=1 // pred_region
      _
    $region9: #{tpu_custom_call.1} parent=1 // pred_fallthru
      _
    // Predicated region
    $region10: #{tpu_custom_call.1} parent=1 // pred_check
      _
    $region11: #{tpu_custom_call.1} parent=1 // pred_check_branch
      %33 = sbr.rel (0) target = $region13
    $region12: #{tpu_custom_call.1} parent=1 // pred_region
      %s35 = ssub.s32 32, 32
      %36 = vsyncadd [#allocation6], %s35
      %s38 = sshll.u32 [#allocation5], 4
      %s39 = int_to_ptr.vmem [resolvable:$true] %s38
      %41 = dma.hbm_to_vmem [thread:$0]  %s2, 32, %s39, [#allocation6]
    $region13: #{tpu_custom_call.1} parent=1 // pred_fallthru
      _
    // Predicated region
    $region14: #{tpu_custom_call.1} parent=1 // pred_check
      _
    $region15: #{tpu_custom_call.1} parent=1 // pred_check_branch
      %43 = sbr.rel (0) target = $region17
    $region16: #{tpu_custom_call.1} parent=1 // pred_region
      _
    $region17: #{tpu_custom_call.1} parent=1 // pred_fallthru
      _
    // Predicated region
    $region18: #{tpu_custom_call.1} parent=1 // pred_check
      _
    $region19: #{tpu_custom_call.1} parent=1 // pred_check_branch
      %45 = sbr.rel (0) target = $region21
    $region20: #{tpu_custom_call.1} parent=1 // pred_region
      %s47 = ssub.s32 1024, 1024
      %48 = vsyncadd [#allocation6], %s47
      %s49 = sshll.u32 [#allocation7], 4
      %s50 = int_to_ptr.vmem [resolvable:$true] %s49
      %55 = dma.hbm_to_vmem [thread:$0]  %s4, 1024, %s50, [#allocation6], 256, 256, 16
    $region21: #{tpu_custom_call.1} parent=1 // pred_fallthru
      _
    // Predicated region
    $region22: #{tpu_custom_call.1} parent=1 // pred_check
      _
    $region23: #{tpu_custom_call.1} parent=1 // pred_check_branch
      %57 = sbr.rel (0) target = $region25
    $region24: #{tpu_custom_call.1} parent=1 // pred_region
      %s59 = ssub.s32 512, 512
      %60 = vsyncadd [#allocation9], %s59
      %s61 = sshll.u32 [#allocation8], 4
      %s62 = int_to_ptr.vmem [resolvable:$true] %s61
      %67 = dma.hbm_to_vmem [thread:$0]  %s5, 512, %s62, [#allocation9], 256, 256, 16
    $region25: #{tpu_custom_call.1} parent=1 // pred_fallthru
      _
    // Predicated region
    $region26: #{tpu_custom_call.1} parent=1 // pred_check
      _
    $region27: #{tpu_custom_call.1} parent=1 // pred_check_branch
      %69 = sbr.rel (0) target = $region29
    $region28: #{tpu_custom_call.1} parent=1 // pred_region
      %s71 = ssub.s32 2048, 2048
      %72 = vsyncadd [#allocation9], %s71
      %s73 = sshll.u32 [#allocation10], 4
      %s74 = int_to_ptr.vmem [resolvable:$true] %s73
      %79 = dma.hbm_to_vmem [thread:$0]  %s6, 2048, %s74, [#allocation9], 512, 512, 32
    $region29: #{tpu_custom_call.1} parent=1 // pred_fallthru
      _
    // Predicated region
    $region30: #{tpu_custom_call.1} parent=1 // pred_check
      _
    $region31: #{tpu_custom_call.1} parent=1 // pred_check_branch
      %81 = sbr.rel (0) target = $region33
    $region32: #{tpu_custom_call.1} parent=1 // pred_region
      _
    $region33: #{tpu_custom_call.1} parent=1 // pred_fallthru
      _
    // Predicated region
    $region34: #{tpu_custom_call.1} parent=1 // pred_check
      _
    $region35: #{tpu_custom_call.1} parent=1 // pred_check_branch
      %83 = sbr.rel (0) target = $region37
    $region36: #{tpu_custom_call.1} parent=1 // pred_region
      %84 = dma.done [#allocation3], 32
    $region37: #{tpu_custom_call.1} parent=1 // pred_fallthru
      _
    // Predicated region
    $region38: #{tpu_custom_call.1} parent=1 // pred_check
      _
    $region39: #{tpu_custom_call.1} parent=1 // pred_check_branch
      %86 = sbr.rel (0) target = $region41
    $region40: #{tpu_custom_call.1} parent=1 // pred_region
      %87 = dma.done [#allocation6], 32
    $region41: #{tpu_custom_call.1} parent=1 // pred_fallthru
      _
    // Predicated region
    $region42: #{tpu_custom_call.1} parent=1 // pred_check
      _
    $region43: #{tpu_custom_call.1} parent=1 // pred_check_branch
      %89 = sbr.rel (0) target = $region45
    $region44: #{tpu_custom_call.1} parent=1 // pred_region
      %90 = dma.done [#allocation6], 1024
    $region45: #{tpu_custom_call.1} parent=1 // pred_fallthru
      _
    // Predicated region
    $region46: #{tpu_custom_call.1} parent=1 // pred_check
      _
    $region47: #{tpu_custom_call.1} parent=1 // pred_check_branch
      %92 = sbr.rel (0) target = $region49
    $region48: #{tpu_custom_call.1} parent=1 // pred_region
      %93 = dma.done [#allocation9], 512
    $region49: #{tpu_custom_call.1} parent=1 // pred_fallthru
      _
    // Predicated region
    $region50: #{tpu_custom_call.1} parent=1 // pred_check
      _
    $region51: #{tpu_custom_call.1} parent=1 // pred_check_branch
      %95 = sbr.rel (0) target = $region53
    $region52: #{tpu_custom_call.1} parent=1 // pred_region
      %96 = dma.done [#allocation9], 2048
    $region53: #{tpu_custom_call.1} parent=1 // pred_fallthru
      _
    %v98 = vld [vmem:[#allocation2] sm:$0x3]
    %v99 = vpack.c.bf16 %v98, %v98
    %v100 = vld [vmem:[#allocation7] sm:$0xff]
    %v101 = vld [vmem:[#allocation7 + $0x8] sm:$0xff]
    %v102 = vld [vmem:[#allocation7 + $0x10] sm:$0xff]
    %v103 = vld [vmem:[#allocation7 + $0x18] sm:$0xff]
    %v104 = vld [vmem:[#allocation7 + $0x20] sm:$0xff]
    %v105 = vld [vmem:[#allocation7 + $0x28] sm:$0xff]
    %v106 = vld [vmem:[#allocation7 + $0x30] sm:$0xff]
    %v107 = vld [vmem:[#allocation7 + $0x38] sm:$0xff]
    %v108 = vld [vmem:[%s1] sm:$0x3]
    %v109 = vpack.c.bf16 %v108, %v108
    %v110 = vld [vmem:[#allocation8] sm:$0xff]
    %v111 = vld [vmem:[#allocation8 + $0x8] sm:$0xff]
    %v112 = vld [vmem:[#allocation8 + $0x10] sm:$0xff]
    %v113 = vld [vmem:[#allocation8 + $0x18] sm:$0xff]
    %v118 = vunpack.c.l.b16 %v110
    %v119 = vunpack.c.h.b16 %v110
    %v120 = vunpack.c.l.b16 %v111
    %v121 = vunpack.c.h.b16 %v111
    %v122 = vunpack.c.l.b16 %v112
    %v123 = vunpack.c.h.b16 %v112
    %v124 = vunpack.c.l.b16 %v113
    %v125 = vunpack.c.h.b16 %v113
    %v126 = vpack.c.b16 %v122, %v118
    %v127 = vpack.c.b16 %v123, %v119
    %v128 = vpack.c.b16 %v124, %v120
    %v129 = vpack.c.b16 %v125, %v121
    %vm134 = vcmask 130048
    %v136 = vsel %vm134, %v109, 0
    %138 = vmatprep.subr.bf16.mxu0 %v127
    %139 = vmatpush1.bf16.msra.mxu0 %v126
    %140 = vmatprep.subr.bf16.mxu0 0
    %141 = vmatpush1.bf16.msra.mxu0 0
    %142 = vmatprep.subr.bf16.mxu0 0
    %143 = vmatpush1.bf16.msra.mxu0 0
    %144 = vmatprep.subr.bf16.mxu0 0
    %145 = vmatpush1.bf16.msra.mxu0 0
    %146 = vmatprep.subr.bf16.mxu0 0
    %147 = vmatpush1.bf16.msra.mxu0 0
    %148 = vmatprep.subr.bf16.mxu0 0
    %149 = vmatpush1.bf16.msra.mxu0 0
    %150 = vmatprep.subr.bf16.mxu0 0
    %151 = vmatpush1.bf16.msra.mxu0 0
    %152 = vmatprep.subr.bf16.mxu0 0
    %153 = vmatpush1.bf16.msra.mxu0 0
    %154 = vmatprep.subr.bf16.mxu0 0
    %155 = vmatpush1.bf16.msra.mxu0 0
    %156 = vmatprep.subr.bf16.mxu0 0
    %157 = vmatpush1.bf16.msra.mxu0 0
    %158 = vmatprep.subr.bf16.mxu0 0
    %159 = vmatpush1.bf16.msra.mxu0 0
    %160 = vmatprep.subr.bf16.mxu0 0
    %161 = vmatpush1.bf16.msra.mxu0 0
    %162 = vmatprep.subr.bf16.mxu0 0
    %163 = vmatpush1.bf16.msra.mxu0 0
    %164 = vmatprep.subr.bf16.mxu0 0
    %165 = vmatpush1.bf16.msra.mxu0 0
    %166 = vmatprep.subr.bf16.mxu0 0
    %167 = vmatpush1.bf16.msra.mxu0 0
    %168 = vmatprep.subr.bf16.mxu0 0
    %169 = vmatpush1.bf16.msra.mxu0 0
    %170 = vmatprep.mubr.bf16.mxu0 0
    %171 = vmatmul.mubr.bf16.gmra.mrb[0].mxu0 %v136
    %v172 = vpop.f32.mrb[0].mxu0
    %v173 = vadd.f32 0.0, %v172
    %v174 = vpop.f32.mrb[0].mxu0
    %v175 = vadd.f32 0.0, %v174
    %v176 = vpop.f32.mrb[0].mxu0
    %v177 = vpop.f32.mrb[0].mxu0
    %178 = vdwg.mxu0
    %179 = vmatprep.subr.bf16.mxu0 %v129
    %180 = vmatpush1.bf16.msra.mxu0 %v128
    %181 = vmatprep.subr.bf16.mxu0 0
    %182 = vmatpush1.bf16.msra.mxu0 0
    %183 = vmatprep.subr.bf16.mxu0 0
    %184 = vmatpush1.bf16.msra.mxu0 0
    %185 = vmatprep.subr.bf16.mxu0 0
    %186 = vmatpush1.bf16.msra.mxu0 0
    %187 = vmatprep.subr.bf16.mxu0 0
    %188 = vmatpush1.bf16.msra.mxu0 0
    %189 = vmatprep.subr.bf16.mxu0 0
    %190 = vmatpush1.bf16.msra.mxu0 0
    %191 = vmatprep.subr.bf16.mxu0 0
    %192 = vmatpush1.bf16.msra.mxu0 0
    %193 = vmatprep.subr.bf16.mxu0 0
    %194 = vmatpush1.bf16.msra.mxu0 0
    %195 = vmatprep.subr.bf16.mxu0 0
    %196 = vmatpush1.bf16.msra.mxu0 0
    %197 = vmatprep.subr.bf16.mxu0 0
    %198 = vmatpush1.bf16.msra.mxu0 0
    %199 = vmatprep.subr.bf16.mxu0 0
    %200 = vmatpush1.bf16.msra.mxu0 0
    %201 = vmatprep.subr.bf16.mxu0 0
    %202 = vmatpush1.bf16.msra.mxu0 0
    %203 = vmatprep.subr.bf16.mxu0 0
    %204 = vmatpush1.bf16.msra.mxu0 0
    %205 = vmatprep.subr.bf16.mxu0 0
    %206 = vmatpush1.bf16.msra.mxu0 0
    %207 = vmatprep.subr.bf16.mxu0 0
    %208 = vmatpush1.bf16.msra.mxu0 0
    %209 = vmatprep.subr.bf16.mxu0 0
    %210 = vmatpush1.bf16.msra.mxu0 0
    %211 = vmatprep.mubr.bf16.mxu0 0
    %212 = vmatmul.mubr.bf16.gmra.mrb[0].mxu0 %v136
    %v213 = vpop.f32.mrb[0].mxu0
    %v214 = vadd.f32 0.0, %v213
    %v215 = vpop.f32.mrb[0].mxu0
    %v216 = vadd.f32 0.0, %v215
    %v217 = vpop.f32.mrb[0].mxu0
    %v218 = vpop.f32.mrb[0].mxu0
    %219 = vdwg.mxu0
    %v228 = vunpack.c.l.b16 %v100
    %v229 = vunpack.c.h.b16 %v100
    %v230 = vunpack.c.l.b16 %v101
    %v231 = vunpack.c.h.b16 %v101
    %v232 = vunpack.c.l.b16 %v102
    %v233 = vunpack.c.h.b16 %v102
    %v234 = vunpack.c.l.b16 %v103
    %v235 = vunpack.c.h.b16 %v103
    %v236 = vunpack.c.l.b16 %v104
    %v237 = vunpack.c.h.b16 %v104
    %v238 = vunpack.c.l.b16 %v105
    %v239 = vunpack.c.h.b16 %v105
    %v240 = vunpack.c.l.b16 %v106
    %v241 = vunpack.c.h.b16 %v106
    %v242 = vunpack.c.l.b16 %v107
    %v243 = vunpack.c.h.b16 %v107
    %v244 = vpack.c.b16 %v232, %v228
    %v245 = vpack.c.b16 %v233, %v229
    %v246 = vpack.c.b16 %v234, %v230
    %v247 = vpack.c.b16 %v235, %v231
    %v248 = vpack.c.b16 %v240, %v236
    %v249 = vpack.c.b16 %v241, %v237
    %v250 = vpack.c.b16 %v242, %v238
    %v251 = vpack.c.b16 %v243, %v239
    %vm260 = vcmask 261120
    %v262 = vsel %vm260, %v99, 0
    %264 = vmatprep.subr.bf16.mxu0 %v245
    %265 = vmatpush1.bf16.msra.mxu0 %v244
    %266 = vmatprep.subr.bf16.mxu0 %v249
    %267 = vmatpush1.bf16.msra.mxu0 %v248
    %268 = vmatprep.subr.bf16.mxu0 0
    %269 = vmatpush1.bf16.msra.mxu0 0
    %270 = vmatprep.subr.bf16.mxu0 0
    %271 = vmatpush1.bf16.msra.mxu0 0
    %272 = vmatprep.subr.bf16.mxu0 0
    %273 = vmatpush1.bf16.msra.mxu0 0
    %274 = vmatprep.subr.bf16.mxu0 0
    %275 = vmatpush1.bf16.msra.mxu0 0
    %276 = vmatprep.subr.bf16.mxu0 0
    %277 = vmatpush1.bf16.msra.mxu0 0
    %278 = vmatprep.subr.bf16.mxu0 0
    %279 = vmatpush1.bf16.msra.mxu0 0
    %280 = vmatprep.subr.bf16.mxu0 0
    %281 = vmatpush1.bf16.msra.mxu0 0
    %282 = vmatprep.subr.bf16.mxu0 0
    %283 = vmatpush1.bf16.msra.mxu0 0
    %284 = vmatprep.subr.bf16.mxu0 0
    %285 = vmatpush1.bf16.msra.mxu0 0
    %286 = vmatprep.subr.bf16.mxu0 0
    %287 = vmatpush1.bf16.msra.mxu0 0
    %288 = vmatprep.subr.bf16.mxu0 0
    %289 = vmatpush1.bf16.msra.mxu0 0
    %290 = vmatprep.subr.bf16.mxu0 0
    %291 = vmatpush1.bf16.msra.mxu0 0
    %292 = vmatprep.subr.bf16.mxu0 0
    %293 = vmatpush1.bf16.msra.mxu0 0
    %294 = vmatprep.subr.bf16.mxu0 0
    %295 = vmatpush1.bf16.msra.mxu0 0
    %296 = vmatprep.mubr.bf16.mxu0 0
    %297 = vmatmul.mubr.bf16.gmra.mrb[0].mxu0 %v262
    %v298 = vpop.f32.mrb[0].mxu0
    %v299 = vadd.f32 %v173, %v298
    %v300 = vpop.f32.mrb[0].mxu0
    %v301 = vadd.f32 %v175, %v300
    %v302 = vpop.f32.mrb[0].mxu0
    %v303 = vpop.f32.mrb[0].mxu0
    %304 = vdwg.mxu0
    %305 = vmatprep.subr.bf16.mxu0 %v247
    %306 = vmatpush1.bf16.msra.mxu0 %v246
    %307 = vmatprep.subr.bf16.mxu0 %v251
    %308 = vmatpush1.bf16.msra.mxu0 %v250
    %309 = vmatprep.subr.bf16.mxu0 0
    %310 = vmatpush1.bf16.msra.mxu0 0
    %311 = vmatprep.subr.bf16.mxu0 0
    %312 = vmatpush1.bf16.msra.mxu0 0
    %313 = vmatprep.subr.bf16.mxu0 0
    %314 = vmatpush1.bf16.msra.mxu0 0
    %315 = vmatprep.subr.bf16.mxu0 0
    %316 = vmatpush1.bf16.msra.mxu0 0
    %317 = vmatprep.subr.bf16.mxu0 0
    %318 = vmatpush1.bf16.msra.mxu0 0
    %319 = vmatprep.subr.bf16.mxu0 0
    %320 = vmatpush1.bf16.msra.mxu0 0
    %321 = vmatprep.subr.bf16.mxu0 0
    %322 = vmatpush1.bf16.msra.mxu0 0
    %323 = vmatprep.subr.bf16.mxu0 0
    %324 = vmatpush1.bf16.msra.mxu0 0
    %325 = vmatprep.subr.bf16.mxu0 0
    %326 = vmatpush1.bf16.msra.mxu0 0
    %327 = vmatprep.subr.bf16.mxu0 0
    %328 = vmatpush1.bf16.msra.mxu0 0
    %329 = vmatprep.subr.bf16.mxu0 0
    %330 = vmatpush1.bf16.msra.mxu0 0
    %331 = vmatprep.subr.bf16.mxu0 0
    %332 = vmatpush1.bf16.msra.mxu0 0
    %333 = vmatprep.subr.bf16.mxu0 0
    %334 = vmatpush1.bf16.msra.mxu0 0
    %335 = vmatprep.subr.bf16.mxu0 0
    %336 = vmatpush1.bf16.msra.mxu0 0
    %337 = vmatprep.mubr.bf16.mxu0 0
    %338 = vmatmul.mubr.bf16.gmra.mrb[0].mxu0 %v262
    %v339 = vpop.f32.mrb[0].mxu0
    %v340 = vadd.f32 %v214, %v339
    %v341 = vpop.f32.mrb[0].mxu0
    %v342 = vadd.f32 %v216, %v341
    %v343 = vpop.f32.mrb[0].mxu0
    %v344 = vpop.f32.mrb[0].mxu0
    %345 = vdwg.mxu0
    %v346 = vld [vmem:[#allocation5] sm:$0x3]
    %v347 = vld [vmem:[#allocation10] sm:$0xff]
    %v348 = vld [vmem:[#allocation10 + $0x8] sm:$0xff]
    %v349 = vld [vmem:[#allocation10 + $0x10] sm:$0xff]
    %v350 = vld [vmem:[#allocation10 + $0x18] sm:$0xff]
    %v351 = vld [vmem:[#allocation10 + $0x20] sm:$0xff]
    %v352 = vld [vmem:[#allocation10 + $0x28] sm:$0xff]
    %v353 = vld [vmem:[#allocation10 + $0x30] sm:$0xff]
    %v354 = vld [vmem:[#allocation10 + $0x38] sm:$0xff]
    %v355 = vld [vmem:[#allocation10 + $0x40] sm:$0xff]
    %v356 = vld [vmem:[#allocation10 + $0x48] sm:$0xff]
    %v357 = vld [vmem:[#allocation10 + $0x50] sm:$0xff]
    %v358 = vld [vmem:[#allocation10 + $0x58] sm:$0xff]
    %v359 = vld [vmem:[#allocation10 + $0x60] sm:$0xff]
    %v360 = vld [vmem:[#allocation10 + $0x68] sm:$0xff]
    %v361 = vld [vmem:[#allocation10 + $0x70] sm:$0xff]
    %v362 = vld [vmem:[#allocation10 + $0x78] sm:$0xff]
    %v364 = vsel %vm260, %v346, 0
    %366 = vmatprep.subr.mxu0 %v348
    %367 = vmatpush1.msra.mxu0 %v347
    %368 = vmatprep.subr.mxu0 %v352
    %369 = vmatpush1.msra.mxu0 %v351
    %370 = vmatprep.subr.mxu0 %v356
    %371 = vmatpush1.msra.mxu0 %v355
    %372 = vmatprep.subr.mxu0 %v360
    %373 = vmatpush1.msra.mxu0 %v359
    %374 = vmatprep.subr.mxu0 0.0
    %375 = vmatpush1.msra.mxu0 0.0
    %376 = vmatprep.subr.mxu0 0.0
    %377 = vmatpush1.msra.mxu0 0.0
    %378 = vmatprep.subr.mxu0 0.0
    %379 = vmatpush1.msra.mxu0 0.0
    %380 = vmatprep.subr.mxu0 0.0
    %381 = vmatpush1.msra.mxu0 0.0
    %382 = vmatprep.subr.mxu0 0.0
    %383 = vmatpush1.msra.mxu0 0.0
    %384 = vmatprep.subr.mxu0 0.0
    %385 = vmatpush1.msra.mxu0 0.0
    %386 = vmatprep.subr.mxu0 0.0
    %387 = vmatpush1.msra.mxu0 0.0
    %388 = vmatprep.subr.mxu0 0.0
    %389 = vmatpush1.msra.mxu0 0.0
    %390 = vmatprep.subr.mxu0 0.0
    %391 = vmatpush1.msra.mxu0 0.0
    %392 = vmatprep.subr.mxu0 0.0
    %393 = vmatpush1.msra.mxu0 0.0
    %394 = vmatprep.subr.mxu0 0.0
    %395 = vmatpush1.msra.mxu0 0.0
    %396 = vmatprep.subr.mxu0 0.0
    %397 = vmatpush1.msra.mxu0 0.0
    %398 = vmatprep.subr.mxu0 0.0
    %399 = vmatpush1.msra.mxu0 0.0
    %400 = vmatprep.subr.mxu0 0.0
    %401 = vmatpush1.msra.mxu0 0.0
    %402 = vmatprep.subr.mxu0 0.0
    %403 = vmatpush1.msra.mxu0 0.0
    %404 = vmatprep.subr.mxu0 0.0
    %405 = vmatpush1.msra.mxu0 0.0
    %406 = vmatprep.subr.mxu0 0.0
    %407 = vmatpush1.msra.mxu0 0.0
    %408 = vmatprep.subr.mxu0 0.0
    %409 = vmatpush1.msra.mxu0 0.0
    %410 = vmatprep.subr.mxu0 0.0
    %411 = vmatpush1.msra.mxu0 0.0
    %412 = vmatprep.subr.mxu0 0.0
    %413 = vmatpush1.msra.mxu0 0.0
    %414 = vmatprep.subr.mxu0 0.0
    %415 = vmatpush1.msra.mxu0 0.0
    %416 = vmatprep.subr.mxu0 0.0
    %417 = vmatpush1.msra.mxu0 0.0
    %418 = vmatprep.subr.mxu0 0.0
    %419 = vmatpush1.msra.mxu0 0.0
    %420 = vmatprep.subr.mxu0 0.0
    %421 = vmatpush1.msra.mxu0 0.0
    %422 = vmatprep.subr.mxu0 0.0
    %423 = vmatpush1.msra.mxu0 0.0
    %424 = vmatprep.subr.mxu0 0.0
    %425 = vmatpush1.msra.mxu0 0.0
    %426 = vmatprep.subr.mxu0 0.0
    %427 = vmatpush1.msra.mxu0 0.0
    %428 = vmatprep.subr.mxu0 0.0
    %429 = vmatpush1.msra.mxu0 0.0
    %430 = vmatprep.mubr.f32.mxu0 0.0
    %431 = vmatmul.mubr.f32.gmra.mrb[0].mxu0 %v364
    %v432 = vpop.f32.mrb[0].mxu0
    %v433 = vadd.f32 0.0, %v432
    %v434 = vpop.f32.mrb[0].mxu0
    %v435 = vadd.f32 0.0, %v434
    %436 = vdwg.mxu0
    %437 = vmatprep.subr.mxu0 %v350
    %438 = vmatpush1.msra.mxu0 %v349
    %439 = vmatprep.subr.mxu0 %v354
    %440 = vmatpush1.msra.mxu0 %v353
    %441 = vmatprep.subr.mxu0 %v358
    %442 = vmatpush1.msra.mxu0 %v357
    %443 = vmatprep.subr.mxu0 %v362
    %444 = vmatpush1.msra.mxu0 %v361
    %445 = vmatprep.subr.mxu0 0.0
    %446 = vmatpush1.msra.mxu0 0.0
    %447 = vmatprep.subr.mxu0 0.0
    %448 = vmatpush1.msra.mxu0 0.0
    %449 = vmatprep.subr.mxu0 0.0
    %450 = vmatpush1.msra.mxu0 0.0
    %451 = vmatprep.subr.mxu0 0.0
    %452 = vmatpush1.msra.mxu0 0.0
    %453 = vmatprep.subr.mxu0 0.0
    %454 = vmatpush1.msra.mxu0 0.0
    %455 = vmatprep.subr.mxu0 0.0
    %456 = vmatpush1.msra.mxu0 0.0
    %457 = vmatprep.subr.mxu0 0.0
    %458 = vmatpush1.msra.mxu0 0.0
    %459 = vmatprep.subr.mxu0 0.0
    %460 = vmatpush1.msra.mxu0 0.0
    %461 = vmatprep.subr.mxu0 0.0
    %462 = vmatpush1.msra.mxu0 0.0
    %463 = vmatprep.subr.mxu0 0.0
    %464 = vmatpush1.msra.mxu0 0.0
    %465 = vmatprep.subr.mxu0 0.0
    %466 = vmatpush1.msra.mxu0 0.0
    %467 = vmatprep.subr.mxu0 0.0
    %468 = vmatpush1.msra.mxu0 0.0
    %469 = vmatprep.subr.mxu0 0.0
    %470 = vmatpush1.msra.mxu0 0.0
    %471 = vmatprep.subr.mxu0 0.0
    %472 = vmatpush1.msra.mxu0 0.0
    %473 = vmatprep.subr.mxu0 0.0
    %474 = vmatpush1.msra.mxu0 0.0
    %475 = vmatprep.subr.mxu0 0.0
    %476 = vmatpush1.msra.mxu0 0.0
    %477 = vmatprep.subr.mxu0 0.0
    %478 = vmatpush1.msra.mxu0 0.0
    %479 = vmatprep.subr.mxu0 0.0
    %480 = vmatpush1.msra.mxu0 0.0
    %481 = vmatprep.subr.mxu0 0.0
    %482 = vmatpush1.msra.mxu0 0.0
    %483 = vmatprep.subr.mxu0 0.0
    %484 = vmatpush1.msra.mxu0 0.0
    %485 = vmatprep.subr.mxu0 0.0
    %486 = vmatpush1.msra.mxu0 0.0
    %487 = vmatprep.subr.mxu0 0.0
    %488 = vmatpush1.msra.mxu0 0.0
    %489 = vmatprep.subr.mxu0 0.0
    %490 = vmatpush1.msra.mxu0 0.0
    %491 = vmatprep.subr.mxu0 0.0
    %492 = vmatpush1.msra.mxu0 0.0
    %493 = vmatprep.subr.mxu0 0.0
    %494 = vmatpush1.msra.mxu0 0.0
    %495 = vmatprep.subr.mxu0 0.0
    %496 = vmatpush1.msra.mxu0 0.0
    %497 = vmatprep.subr.mxu0 0.0
    %498 = vmatpush1.msra.mxu0 0.0
    %499 = vmatprep.subr.mxu0 0.0
    %500 = vmatpush1.msra.mxu0 0.0
    %501 = vmatprep.mubr.f32.mxu0 0.0
    %502 = vmatmul.mubr.f32.gmra.mrb[0].mxu0 %v364
    %v503 = vpop.f32.mrb[0].mxu0
    %v504 = vadd.f32 0.0, %v503
    %v505 = vpop.f32.mrb[0].mxu0
    %v506 = vadd.f32 0.0, %v505
    %507 = vdwg.mxu0
    %v508 = vadd.f32 %v299, %v433
    %v509 = vadd.f32 %v301, %v435
    %v510 = vadd.f32 %v340, %v504
    %v511 = vadd.f32 %v342, %v506
    %v512 = vld [vmem:[%s7] sm:$0xf]
    %v514 = vlaneseq
    %v515 = vshrl.u32 %v514, 7
    %v516 = vsub.s32 0, %v515
    %v517 = vrot.slane %v512, %v516
    %v518 = vlaneseq
    %v519 = vshrl.u32 %v518, 7
    %v520 = vsub.s32 1, %v519
    %v521 = vrot.slane %v512, %v520
    %v522 = vlaneseq
    %v523 = vshrl.u32 %v522, 7
    %v524 = vsub.s32 2, %v523
    %v525 = vrot.slane %v512, %v524
    %v526 = vlaneseq
    %v527 = vshrl.u32 %v526, 7
    %v528 = vsub.s32 3, %v527
    %v529 = vrot.slane %v512, %v528
    %v534 = vadd.f32 %v508, %v517
    %v535 = vadd.f32 %v509, %v521
    %v536 = vadd.f32 %v510, %v525
    %v537 = vadd.f32 %v511, %v529
    %v538 = vxor.u32 %v534, 2147483648
    %v539 = vmul.f32 %v538, 1.442695
    %v540 = vpow.pop %v539
    %v541 = vadd.f32 %v540, 1.0
    %v542 = vrcp.pop %v541
    %v543 = vmul.f32 1.0, %v542
    %v544 = vxor.u32 %v535, 2147483648
    %v545 = vmul.f32 %v544, 1.442695
    %v546 = vpow.pop %v545
    %v547 = vadd.f32 %v546, 1.0
    %v548 = vrcp.pop %v547
    %v549 = vmul.f32 1.0, %v548
    %v550 = vtanh.pop %v536
    %v551 = vxor.u32 %v537, 2147483648
    %v552 = vmul.f32 %v551, 1.442695
    %v553 = vpow.pop %v552
    %v554 = vadd.f32 %v553, 1.0
    %v555 = vrcp.pop %v554
    %v556 = vmul.f32 1.0, %v555
    %v557 = vld [vmem:[%s3] sm:$0x3]
    %v558 = vmul.f32 %v549, %v557
    %v559 = vmul.f32 %v543, %v550
    %v560 = vadd.f32 %v558, %v559
    %v561 = vtanh.pop %v560
    %v562 = vmul.f32 %v556, %v561
    %vm563 = vcmask 254976
    %564 = vst.msk [vmem:[#allocation11] sm:$0x3] %vm563, %v562
    %565 = vst.msk [vmem:[#allocation12] sm:$0x3] %vm563, %v560
    // Predicated region
    $region54: #{tpu_custom_call.1} parent=1 // pred_check
      _
    $region55: #{tpu_custom_call.1} parent=1 // pred_check_branch
      %567 = sbr.rel (0) target = $region57
    $region56: #{tpu_custom_call.1} parent=1 // pred_region
      %s569 = ssub.s32 32, 32
      %570 = vsyncadd [#allocation4], %s569
      %s572 = sshll.u32 [#allocation11], 4
      %s573 = int_to_ptr.vmem [resolvable:$true] %s572
      %575 = dma.vmem_to_hbm [thread:$0]  %s573, 32, %s8, [#allocation4]
    $region57: #{tpu_custom_call.1} parent=1 // pred_fallthru
      _
    // Predicated region
    $region58: #{tpu_custom_call.1} parent=1 // pred_check
      _
    $region59: #{tpu_custom_call.1} parent=1 // pred_check_branch
      %577 = sbr.rel (0) target = $region61
    $region60: #{tpu_custom_call.1} parent=1 // pred_region
      %s579 = ssub.s32 32, 32
      %580 = vsyncadd [#allocation13], %s579
      %s582 = sshll.u32 [#allocation12], 4
      %s583 = int_to_ptr.vmem [resolvable:$true] %s582
      %585 = dma.vmem_to_hbm [thread:$0]  %s583, 32, %s9, [#allocation13]
    $region61: #{tpu_custom_call.1} parent=1 // pred_fallthru
      _
    // Predicated region
    $region62: #{tpu_custom_call.1} parent=1 // pred_check
      _
    $region63: #{tpu_custom_call.1} parent=1 // pred_check_branch
      %587 = sbr.rel (0) target = $region65
    $region64: #{tpu_custom_call.1} parent=1 // pred_region
      %588 = dma.done [#allocation4], 32
    $region65: #{tpu_custom_call.1} parent=1 // pred_fallthru
      _
    // Predicated region
    $region66: #{tpu_custom_call.1} parent=1 // pred_check
      _
    $region67: #{tpu_custom_call.1} parent=1 // pred_check_branch
      %590 = sbr.rel (0) target = $region69
    $region68: #{tpu_custom_call.1} parent=1 // pred_region
      %591 = dma.done [#allocation13], 32
    $region69: #{tpu_custom_call.1} parent=1 // pred_fallthru
      _
    %592 = vsyncpa [#allocation3], 1
    %593 = vsyncpa [#allocation6], 1
    %594 = vsyncpa [#allocation9], 1
    %595 = vsyncpa [#allocation4], 1
    %596 = vsyncpa [#allocation13], 1

</llo_original>
